<compile_context>
chip_gen: v7x
topology: tpu7x:2x2x1
jax: 0.10.0
libtpu: 0.0.40
codegen_flags: <defaults>
</compile_context>

<pallas_src>
from functools import lru_cache, partial

import jax
import jax.numpy as jnp
from jax import lax
from jax.experimental import pallas as pl
from jax.experimental.pallas import tpu as pltpu

LANES = 128


def _cdiv(a, b):
    return -(-a // b)


def _round_up(a, b):
    return _cdiv(a, b) * b


@lru_cache(maxsize=1)
def _device_profile():
    """Returns (tensorcores_per_device, target_input_block_bytes)."""
    try:
        kind = jax.devices()[0].device_kind.lower()
    except Exception:  # pragma: no cover - be robust on exotic backends
        kind = ""
    if "v7" in kind or "7x" in kind:
        return 2, 8 << 20     # 2 TC/chip, ~3.2 TB/s: big tiles hide the ~0.35us/step tax
    if "v6" in kind:
        return 1, 4 << 20     # 1 TC, ~1.3-1.4 TB/s
    if "v5p" in kind or "v4" in kind:
        return 2, 4 << 20     # megacore chips
    return 1, 2 << 20         # v5e / v2 / v3 / unknown: conservative (small scoped VMEM)


def _minmax_kernel(x_ref, min_ref, max_ref, *, group_rows, groups, blocks_per_core,
                   total_blocks, rows_in_last_block, unroll):
    """Grid = (slab, row-block). Outputs are per-slab resident (group_rows, 128) accumulators."""
    c = pl.program_id(0)
    i = pl.program_id(1)

    @pl.when(i == 0)
    def _init():
        min_ref[...] = jnp.full(min_ref.shape, jnp.inf, dtype=min_ref.dtype)
        max_ref[...] = jnp.full(max_ref.shape, -jnp.inf, dtype=max_ref.dtype)

    def _run(masked):
        # Hoisted iota: JAX does not CSE broadcast_in_dim inside the loop.
        row_in_block = (lax.broadcasted_iota(jnp.int32, (group_rows, LANES), 0)
                        if masked else None)

        def body(g, carry):
            mn, mx = carry
            start = pl.multiple_of(g * group_rows, group_rows)
            sl = x_ref[pl.ds(start, group_rows), :].astype(jnp.float32)
            if masked:
                ok = (row_in_block + g * group_rows) < rows_in_last_block
                lo = jnp.where(ok, sl, jnp.inf)
                hi = jnp.where(ok, sl, -jnp.inf)
            else:
                lo = hi = sl
            return jnp.minimum(mn, lo), jnp.maximum(mx, hi)

        mn, mx = lax.fori_loop(0, groups, body, (min_ref[...], max_ref[...]),
                               unroll=unroll)
        min_ref[...] = mn
        max_ref[...] = mx

    if rows_in_last_block == 0:
        _run(False)                       # every row-block is full: no masking anywhere
    elif total_blocks == 1:
        _run(True)                        # single (partial) block
    else:
        # Only the final row-block is partial; mask it, keep every other step unmasked.
        blk = jnp.minimum(c * blocks_per_core + i, total_blocks - 1)
        is_last = blk == total_blocks - 1

        @pl.when(jnp.logical_not(is_last))
        def _full():
            _run(False)

        @pl.when(is_last)
        def _masked():
            _run(True)


def _minmax_lane_rows(x2d, max_block_rows):
    """Min/max of a (rows, 128) array (native dtype) via the Pallas streaming kernel."""
    rows = x2d.shape[0]
    itemsize = jnp.dtype(x2d.dtype).itemsize
    packing = max(1, 4 // itemsize)            # 32-bit sublane packing factor
    group_rows = 8 * packing                   # f32: 8, bf16: 16, int8/fp8: 32

    num_tc, target_bytes = _device_profile()
    target_rows = max(1024, (target_bytes // (LANES * itemsize)) // 1024 * 1024)
    if max_block_rows is not None:             # test / tuning override
        target_rows = max(group_rows, _round_up(int(max_block_rows), 32))
    block_rows = min(target_rows, _round_up(rows, 32))
    block_rows = _round_up(block_rows, group_rows)

    total_blocks = _cdiv(rows, block_rows)
    slabs = num_tc if total_blocks >= 2 else 1
    blocks_per_core = _cdiv(total_blocks, slabs)
    rows_in_last_block = rows % block_rows     # 0 => every block full
    groups = block_rows // group_rows
    unroll = max(1, min(8, groups))

    block_bytes = block_rows * LANES * itemsize
    vmem_limit = int(min(60 << 20, max(32 << 20, 4 * block_bytes)))

    kernel = partial(
        _minmax_kernel,
        group_rows=group_rows,
        groups=groups,
        blocks_per_core=blocks_per_core,
        total_blocks=total_blocks,
        rows_in_last_block=rows_in_last_block,
        unroll=unroll,
    )

    def in_map(c, i):
        # Clamp out-of-range (core, step) pairs onto the last real block; duplicate
        # contributions are harmless for min/max (idempotent).
        return (jnp.minimum(c * blocks_per_core + i, total_blocks - 1), 0)

    acc_spec = pl.BlockSpec((None, group_rows, LANES), lambda c, i: (c, 0, 0))

    min_parts, max_parts = pl.pallas_call(
        kernel,
        out_shape=(
            jax.ShapeDtypeStruct((slabs, group_rows, LANES), jnp.float32),
            jax.ShapeDtypeStruct((slabs, group_rows, LANES), jnp.float32),
        ),
        grid=(slabs, blocks_per_core),
        in_specs=[pl.BlockSpec((block_rows, LANES), in_map)],
        out_specs=(acc_spec, acc_spec),
        compiler_params=pltpu.CompilerParams(
            dimension_semantics=("parallel", "arbitrary"),
            vmem_limit_bytes=vmem_limit),
    )(x2d)

    # One-shot cross-lane / cross-slab reduce of the tiny partials (fused inside the same jit).
    return jnp.min(min_parts), jnp.max(max_parts)


def _minmax_flat(x, max_block_rows):
    """(min, max) float32 scalars over all elements of x (any shape / dtype)."""
    flat = x.reshape(-1)                        # free for contiguous input
    n = flat.shape[0]
    rem = n % LANES
    n_main = n - rem

    mins, maxs = [], []
    if n_main > 0:
        # TODO(synk): for ragged n (rem > 0) this prefix slice materializes a copy; the fully
        # zero-copy alternative is a 1-D block stream with in-kernel lane masking.
        x2d = (flat if rem == 0 else flat[:n_main]).reshape(n_main // LANES, LANES)
        kmin, kmax = _minmax_lane_rows(x2d, max_block_rows)
        mins.append(kmin)
        maxs.append(kmax)
    if rem > 0:
        tail = flat[n_main:].astype(jnp.float32)       # < 128 elements, plain jnp, same jit
        mins.append(jnp.min(tail))
        maxs.append(jnp.max(tail))

    cur_min, cur_max = mins[0], maxs[0]
    for m in mins[1:]:
        cur_min = jnp.minimum(cur_min, m)
    for m in maxs[1:]:
        cur_max = jnp.maximum(cur_max, m)
    return cur_min, cur_max


@partial(jax.jit, static_argnames=("max_block_rows",))
def _observe(x, running_min, running_max, *, max_block_rows=None):
    """Single jitted dispatch: streaming min/max + tail + running-state merge."""
    cur_min, cur_max = _minmax_flat(x, max_block_rows)
    return (jnp.minimum(running_min, cur_min).astype(jnp.float32),
            jnp.maximum(running_max, cur_max).astype(jnp.float32))


class AffineQuantizedMinMaxObserver:
    """JAX/Pallas port of the torchao affine min/max observer (PerTensor, asymmetric int8)."""

    def __init__(self, quant_min=-128, quant_max=127, eps=None, preserve_zero=True,
                 max_block_rows=None):
        # mapping_type=ASYMMETRIC, target_dtype=int8, granularity_type=PerTensor
        self.quant_min = quant_min
        self.quant_max = quant_max
        self.eps = eps                      # None -> use finfo(input dtype).eps, as torchao does
        self.preserve_zero = preserve_zero
        self.min_val = None                 # running stats, updated in forward
        self.max_val = None
        self._input_dtype = None
        self._max_block_rows = max_block_rows   # tuning/testing override for the row-block size

    def forward(self, x):
        if x.size == 0:
            # torchao warns and skips the update for empty tensors
            return x
        self._input_dtype = x.dtype
        if self.min_val is None:
            prev_min = jnp.full((), jnp.inf, jnp.float32)
            prev_max = jnp.full((), -jnp.inf, jnp.float32)
        else:
            prev_min, prev_max = self.min_val, self.max_val
        self.min_val, self.max_val = _observe(
            x, prev_min, prev_max, max_block_rows=self._max_block_rows)
        # Observer returns the original input unchanged.
        return x

    def calculate_qparams(self):
        assert self.min_val is not None, "must call forward() first"
        if self.eps is not None:
            eps = self.eps
        elif jnp.issubdtype(self._input_dtype, jnp.floating):
            eps = float(jnp.finfo(self._input_dtype).eps)
        else:
            eps = float(jnp.finfo(jnp.float32).eps)
        if self.preserve_zero:
            min_v = jnp.minimum(self.min_val, 0.0)
            max_v = jnp.maximum(self.max_val, 0.0)
        else:
            min_v, max_v = self.min_val, self.max_val
        # scalar glue (not the hot path) stays in plain JAX
        scale = (max_v - min_v) / float(self.quant_max - self.quant_min)
        scale = jnp.maximum(scale, eps)
        zero_point = self.quant_min - jnp.round(min_v / scale)    # matches torchao (INT domain)
        zero_point = jnp.clip(zero_point, self.quant_min, self.quant_max)
        return scale.astype(jnp.float32), zero_point.astype(jnp.int32)


if __name__ == "__main__":
    k0, k1, k2, k3 = jax.random.split(jax.random.PRNGKey(0), 4)

    # NCHW conv-style activation (2048 elements, 128-divisible: zero-copy fast path).
    x = jax.random.normal(k0, (2, 4, 16, 16), dtype=jnp.float32) * 3.0 + 0.5
    # Ragged shape (1155 elements): exercises the masked block + <128-element tail path.
    x2 = jax.random.normal(k1, (3, 5, 7, 11), dtype=jnp.float32) * 5.0 - 1.0

    obs = AffineQuantizedMinMaxObserver()

    out = obs.forward(x)
    out = jax.block_until_ready(out)
    assert out.shape == x.shape and out.dtype == x.dtype
    assert jnp.allclose(out, x)
    assert jnp.allclose(obs.min_val, jnp.min(x)), (obs.min_val, jnp.min(x))
    assert jnp.allclose(obs.max_val, jnp.max(x)), (obs.max_val, jnp.max(x))

    out2 = obs.forward(x2)
    out2 = jax.block_until_ready(out2)
    ref_min = jnp.minimum(jnp.min(x), jnp.min(x2))
    ref_max = jnp.maximum(jnp.max(x), jnp.max(x2))
    assert jnp.allclose(out2, x2)
    assert jnp.allclose(obs.min_val, ref_min), (obs.min_val, ref_min)
    assert jnp.allclose(obs.max_val, ref_max), (obs.max_val, ref_max)

    scale, zero_point = obs.calculate_qparams()
    jax.block_until_ready((scale, zero_point))

    # reference qparams check
    min_v = jnp.minimum(ref_min, 0.0)
    max_v = jnp.maximum(ref_max, 0.0)
    ref_scale = jnp.maximum((max_v - min_v) / 255.0, jnp.finfo(jnp.float32).eps)
    ref_zp = jnp.clip(-128 - jnp.round(min_v / ref_scale), -128, 127).astype(jnp.int32)
    assert jnp.allclose(scale, ref_scale)
    assert int(zero_point) == int(ref_zp)

    # bf16 input: exercises native-dtype streaming with 16-row sublane packing.
    x3 = (jax.random.normal(k2, (4, 384), dtype=jnp.float32) * 2.0).astype(jnp.bfloat16)
    obs_bf16 = AffineQuantizedMinMaxObserver()
    obs_bf16.forward(x3)
    jax.block_until_ready((obs_bf16.min_val, obs_bf16.max_val))
    assert jnp.allclose(obs_bf16.min_val, jnp.min(x3).astype(jnp.float32))
    assert jnp.allclose(obs_bf16.max_val, jnp.max(x3).astype(jnp.float32))

    # Multi-block grid + partial-last-block path (small forced block for coverage).
    x4 = jax.random.normal(k3, (257, 128), dtype=jnp.float32) * 7.0
    obs_mb = AffineQuantizedMinMaxObserver(max_block_rows=64)
    obs_mb.forward(x4)
    jax.block_until_ready((obs_mb.min_val, obs_mb.max_val))
    assert jnp.allclose(obs_mb.min_val, jnp.min(x4))
    assert jnp.allclose(obs_mb.max_val, jnp.max(x4))

    print("KERNEL_OK")
</pallas_src>

<mosaic_0001>
module attributes {stable_mosaic.version = 11 : i64} {
  func.func @_minmax_kernel(%arg0: i32, %arg1: i32, %arg2: memref<32x128xf32, #tpu.memory_space<vmem>>, %arg3: memref<1x8x128xf32, #tpu.memory_space<vmem>>, %arg4: memref<1x8x128xf32, #tpu.memory_space<vmem>>) attributes {dimension_semantics = [#tpu.dimension_semantics<parallel>, #tpu.dimension_semantics<arbitrary>], iteration_bounds = array<i64: 1, 1>, scalar_prefetch = 0 : i64, scratch_operands = 0 : i64, tpu.core_type = #tpu.core_type<tc>, window_params = [{transform_indices = @transform_0, window_bounds = array<i64: 32, 128>}, {transform_indices = @transform_1, window_bounds = array<i64: 1, 8, 128>}, {transform_indices = @transform_2, window_bounds = array<i64: 1, 8, 128>}]} {
    %c0_i32 = arith.constant 0 : i32
    %0 = arith.cmpi eq, %arg1, %c0_i32 : i32
    %1 = arith.extui %0 : i1 to i32
    %c0_i32_0 = arith.constant 0 : i32
    %2 = arith.cmpi ne, %1, %c0_i32_0 : i32
    scf.if %2 {
      %cst_34 = arith.constant 0x7F800000 : f32
      %74 = vector.broadcast %cst_34 : f32 to vector<8x128xf32>
      %c0_35 = arith.constant 0 : index
      %c0_36 = arith.constant 0 : index
      %c0_37 = arith.constant 0 : index
      %75 = vector.load %arg3[%c0_35, %c0_36, %c0_37] : memref<1x8x128xf32, #tpu.memory_space<vmem>>, vector<1x8x128xf32>
      %76 = vector.shape_cast %75 : vector<1x8x128xf32> to vector<8x128xf32>
      %77 = vector.shape_cast %74 : vector<8x128xf32> to vector<1x8x128xf32>
      tpu.vector_store %arg3[%c0_35, %c0_36, %c0_37], %77 {strides = array<i32>} : memref<1x8x128xf32, #tpu.memory_space<vmem>>, vector<1x8x128xf32>,
      %cst_38 = arith.constant 0xFF800000 : f32
      %78 = vector.broadcast %cst_38 : f32 to vector<8x128xf32>
      %c0_39 = arith.constant 0 : index
      %c0_40 = arith.constant 0 : index
      %c0_41 = arith.constant 0 : index
      %79 = vector.load %arg4[%c0_39, %c0_40, %c0_41] : memref<1x8x128xf32, #tpu.memory_space<vmem>>, vector<1x8x128xf32>
      %80 = vector.shape_cast %79 : vector<1x8x128xf32> to vector<8x128xf32>
      %81 = vector.shape_cast %78 : vector<8x128xf32> to vector<1x8x128xf32>
      tpu.vector_store %arg4[%c0_39, %c0_40, %c0_41], %81 {strides = array<i32>} : memref<1x8x128xf32, #tpu.memory_space<vmem>>, vector<1x8x128xf32>,
    } else {
    }
    %3 = tpu.iota {dimensions = array<i32: 0>} : vector<8x128xi32>
    %c0 = arith.constant 0 : index
    %c0_1 = arith.constant 0 : index
    %c0_2 = arith.constant 0 : index
    %4 = vector.load %arg3[%c0, %c0_1, %c0_2] : memref<1x8x128xf32, #tpu.memory_space<vmem>>, vector<1x8x128xf32>
    %5 = vector.shape_cast %4 : vector<1x8x128xf32> to vector<8x128xf32>
    %c0_3 = arith.constant 0 : index
    %c0_4 = arith.constant 0 : index
    %c0_5 = arith.constant 0 : index
    %6 = vector.load %arg4[%c0_3, %c0_4, %c0_5] : memref<1x8x128xf32, #tpu.memory_space<vmem>>, vector<1x8x128xf32>
    %7 = vector.shape_cast %6 : vector<1x8x128xf32> to vector<8x128xf32>
    %c0_i32_6 = arith.constant 0 : i32
    %c8_i32 = arith.constant 8 : i32
    %8 = arith.muli %c0_i32_6, %c8_i32 : i32
    %9 = tpu.assume_multiple %8, 8 : i32
    %10 = arith.index_cast %9 : i32 to index
    %c0_7 = arith.constant 0 : index
    %11 = vector.load %arg2[%10, %c0_7] : memref<32x128xf32, #tpu.memory_space<vmem>>, vector<8x128xf32>
    %c8_i32_8 = arith.constant 8 : i32
    %12 = arith.muli %c0_i32_6, %c8_i32_8 : i32
    %13 = vector.broadcast %12 : i32 to vector<8x128xi32>
    %14 = arith.addi %3, %13 : vector<8x128xi32>
    %c16_i32 = arith.constant 16 : i32
    %15 = vector.broadcast %c16_i32 : i32 to vector<8x128xi32>
    %16 = arith.cmpi slt, %14, %15 : vector<8x128xi32>
    %cst = arith.constant 0x7F800000 : f32
    %17 = vector.broadcast %cst : f32 to vector<8x128xf32>
    %18 = arith.select %16, %11, %17 : vector<8x128xi1>, vector<8x128xf32>
    %cst_9 = arith.constant 0xFF800000 : f32
    %19 = vector.broadcast %cst_9 : f32 to vector<8x128xf32>
    %20 = arith.select %16, %11, %19 : vector<8x128xi1>, vector<8x128xf32>
    %21 = arith.minimumf %5, %18 : vector<8x128xf32>
    %22 = arith.maximumf %7, %20 : vector<8x128xf32>
    %c1_i32 = arith.constant 1 : i32
    %c8_i32_10 = arith.constant 8 : i32
    %23 = arith.muli %c1_i32, %c8_i32_10 : i32
    %24 = tpu.assume_multiple %23, 8 : i32
    %25 = arith.index_cast %24 : i32 to index
    %c0_11 = arith.constant 0 : index
    %26 = vector.load %arg2[%25, %c0_11] : memref<32x128xf32, #tpu.memory_space<vmem>>, vector<8x128xf32>
    %c8_i32_12 = arith.constant 8 : i32
    %27 = arith.muli %c1_i32, %c8_i32_12 : i32
    %28 = vector.broadcast %27 : i32 to vector<8x128xi32>
    %29 = arith.addi %3, %28 : vector<8x128xi32>
    %c16_i32_13 = arith.constant 16 : i32
    %30 = vector.broadcast %c16_i32_13 : i32 to vector<8x128xi32>
    %31 = arith.cmpi slt, %29, %30 : vector<8x128xi32>
    %cst_14 = arith.constant 0x7F800000 : f32
    %32 = vector.broadcast %cst_14 : f32 to vector<8x128xf32>
    %33 = arith.select %31, %26, %32 : vector<8x128xi1>, vector<8x128xf32>
    %cst_15 = arith.constant 0xFF800000 : f32
    %34 = vector.broadcast %cst_15 : f32 to vector<8x128xf32>
    %35 = arith.select %31, %26, %34 : vector<8x128xi1>, vector<8x128xf32>
    %36 = arith.minimumf %21, %33 : vector<8x128xf32>
    %37 = arith.maximumf %22, %35 : vector<8x128xf32>
    %c2_i32 = arith.constant 2 : i32
    %c8_i32_16 = arith.constant 8 : i32
    %38 = arith.muli %c2_i32, %c8_i32_16 : i32
    %39 = tpu.assume_multiple %38, 8 : i32
    %40 = arith.index_cast %39 : i32 to index
    %c0_17 = arith.constant 0 : index
    %41 = vector.load %arg2[%40, %c0_17] : memref<32x128xf32, #tpu.memory_space<vmem>>, vector<8x128xf32>
    %c8_i32_18 = arith.constant 8 : i32
    %42 = arith.muli %c2_i32, %c8_i32_18 : i32
    %43 = vector.broadcast %42 : i32 to vector<8x128xi32>
    %44 = arith.addi %3, %43 : vector<8x128xi32>
    %c16_i32_19 = arith.constant 16 : i32
    %45 = vector.broadcast %c16_i32_19 : i32 to vector<8x128xi32>
    %46 = arith.cmpi slt, %44, %45 : vector<8x128xi32>
    %cst_20 = arith.constant 0x7F800000 : f32
    %47 = vector.broadcast %cst_20 : f32 to vector<8x128xf32>
    %48 = arith.select %46, %41, %47 : vector<8x128xi1>, vector<8x128xf32>
    %cst_21 = arith.constant 0xFF800000 : f32
    %49 = vector.broadcast %cst_21 : f32 to vector<8x128xf32>
    %50 = arith.select %46, %41, %49 : vector<8x128xi1>, vector<8x128xf32>
    %51 = arith.minimumf %36, %48 : vector<8x128xf32>
    %52 = arith.maximumf %37, %50 : vector<8x128xf32>
    %c3_i32 = arith.constant 3 : i32
    %c8_i32_22 = arith.constant 8 : i32
    %53 = arith.muli %c3_i32, %c8_i32_22 : i32
    %54 = tpu.assume_multiple %53, 8 : i32
    %55 = arith.index_cast %54 : i32 to index
    %c0_23 = arith.constant 0 : index
    %56 = vector.load %arg2[%55, %c0_23] : memref<32x128xf32, #tpu.memory_space<vmem>>, vector<8x128xf32>
    %c8_i32_24 = arith.constant 8 : i32
    %57 = arith.muli %c3_i32, %c8_i32_24 : i32
    %58 = vector.broadcast %57 : i32 to vector<8x128xi32>
    %59 = arith.addi %3, %58 : vector<8x128xi32>
    %c16_i32_25 = arith.constant 16 : i32
    %60 = vector.broadcast %c16_i32_25 : i32 to vector<8x128xi32>
    %61 = arith.cmpi slt, %59, %60 : vector<8x128xi32>
    %cst_26 = arith.constant 0x7F800000 : f32
    %62 = vector.broadcast %cst_26 : f32 to vector<8x128xf32>
    %63 = arith.select %61, %56, %62 : vector<8x128xi1>, vector<8x128xf32>
    %cst_27 = arith.constant 0xFF800000 : f32
    %64 = vector.broadcast %cst_27 : f32 to vector<8x128xf32>
    %65 = arith.select %61, %56, %64 : vector<8x128xi1>, vector<8x128xf32>
    %66 = arith.minimumf %51, %63 : vector<8x128xf32>
    %67 = arith.maximumf %52, %65 : vector<8x128xf32>
    %c4_i32 = arith.constant 4 : i32
    %c0_28 = arith.constant 0 : index
    %c0_29 = arith.constant 0 : index
    %c0_30 = arith.constant 0 : index
    %68 = vector.load %arg3[%c0_28, %c0_29, %c0_30] : memref<1x8x128xf32, #tpu.memory_space<vmem>>, vector<1x8x128xf32>
    %69 = vector.shape_cast %68 : vector<1x8x128xf32> to vector<8x128xf32>
    %70 = vector.shape_cast %66 : vector<8x128xf32> to vector<1x8x128xf32>
    tpu.vector_store %arg3[%c0_28, %c0_29, %c0_30], %70 {strides = array<i32>} : memref<1x8x128xf32, #tpu.memory_space<vmem>>, vector<1x8x128xf32>,
    %c0_31 = arith.constant 0 : index
    %c0_32 = arith.constant 0 : index
    %c0_33 = arith.constant 0 : index
    %71 = vector.load %arg4[%c0_31, %c0_32, %c0_33] : memref<1x8x128xf32, #tpu.memory_space<vmem>>, vector<1x8x128xf32>
    %72 = vector.shape_cast %71 : vector<1x8x128xf32> to vector<8x128xf32>
    %73 = vector.shape_cast %67 : vector<8x128xf32> to vector<1x8x128xf32>
    tpu.vector_store %arg4[%c0_31, %c0_32, %c0_33], %73 {strides = array<i32>} : memref<1x8x128xf32, #tpu.memory_space<vmem>>, vector<1x8x128xf32>,
    return
  }
  func.func @transform_0(%arg0: i32, %arg1: i32) -> (i32, i32) {
    %c1_i32 = arith.constant 1 : i32
    %0 = arith.muli %arg0, %c1_i32 : i32
    %1 = arith.addi %0, %arg1 : i32
    %c0_i32 = arith.constant 0 : i32
    %2 = arith.minsi %1, %c0_i32 : i32
    %c0_i32_0 = arith.constant 0 : i32
    %c0_i32_1 = arith.constant 0 : i32
    return %2, %c0_i32_0 : i32, i32
  }
  func.func @transform_1(%arg0: i32, %arg1: i32) -> (i32, i32, i32) {
    %c0_i32 = arith.constant 0 : i32
    %c0_i32_0 = arith.constant 0 : i32
    %c0_i32_1 = arith.constant 0 : i32
    return %arg0, %c0_i32, %c0_i32_0 : i32, i32, i32
  }
  func.func @transform_2(%arg0: i32, %arg1: i32) -> (i32, i32, i32) {
    %c0_i32 = arith.constant 0 : i32
    %c0_i32_0 = arith.constant 0 : i32
    %c0_i32_1 = arith.constant 0 : i32
    return %arg0, %c0_i32, %c0_i32_0 : i32, i32, i32
  }
}

</mosaic_0001>

<llo_original>
// kernel: _observe.1
$region0: #{_observe.1}
  #allocation0 [shape = 'u32[]', space=smem, size = 0x4, offset = 0x4, fixed_abs, tag = 'smem constant byte address 0x4 - core index']
  #allocation1 [shape = 'u32[144,128]{1,0:T(1,128)}', space=vmem, size = 0x12000, scoped, tag = 'internal scratch']
  %s0 = inlined_call_operand.vmem [shape: f32[16,128], index: 0, kind: input, shape index: {}]
  %s1 = inlined_call_operand.vmem [shape: f32[1,8,128], index: 1, kind: output, shape index: {0}]
  %s2 = inlined_call_operand.vmem [shape: f32[1,8,128], index: 2, kind: output, shape index: {1}]
  %3 = xla_tuple %s1, %s2
  %s4 = sld [smem:[#allocation0]]
  $region26: #{_observe.1} parent=0
    _
  %s6 = ssub.s32 1, %s4
  %s7 = scalar_select 0, %s6, %s4
  // Predicated region
  $region2: #{_observe.1} parent=0 // pred_check
    _
  $region3: #{_observe.1} parent=0 // pred_check_branch
    %9 = sbr.rel (0) target = $region5
  $region4: #{_observe.1} parent=0 // pred_region
    %s10 = sadd.s32 0, 0
    %p11 = scmp.lt.s32.totalorder %s10, 0
    %s12 = scalar_select %p11, %s10, 0
    %s13 = smul.u32 4, %s12
    %s14 = ssub.s32 2, %s13
    %s15 = smul.u32 128, %s14
    %p16 = scmp.lt.s32.totalorder %s13, 1
    %s17 = scalar_select %p16, %s13, 1
    %s18 = smul.addr %s17, 8
    %s19 = scalar_lea.vmem %s0, %s18
    %s20 = sadd.s32 0, 0
    %p21 = scmp.lt.s32.totalorder %s20, 0
    %s22 = scalar_select %p21, %s20, 0
    %s23 = smul.u32 4, %s22
    %s24 = ssub.s32 2, %s23
    %s25 = smul.u32 128, %s24
  $region5: #{_observe.1} parent=0 // pred_fallthru
    _
  %s26 = sadd.s32 0, 0
  %p27 = scmp.lt.s32.totalorder %s26, 0
  %s28 = scalar_select %p27, %s26, 0
  %s29 = smul.u32 4, %s28
  %s30 = ssub.s32 2, %s29
  %s31 = smul.u32 128, %s30
  %p32 = scmp.lt.s32.totalorder %s29, 1
  %s33 = scalar_select %p32, %s29, 1
  %s34 = smul.addr %s33, 8
  %s35 = scalar_lea.vmem %s0, %s34
  %s36 = sadd.s32 0, 0
  %p37 = scmp.lt.s32.totalorder %s36, 0
  %s38 = scalar_select %p37, %s36, 0
  %s39 = smul.u32 4, %s38
  %s40 = ssub.s32 2, %s39
  %s41 = smul.u32 128, %s40
  %p42 = scmp.lt.s32.totalorder %s39, 1
  %s43 = scalar_select %p42, %s39, 1
  %s44 = smul.addr %s43, 8
  %s45 = scalar_lea.vmem %s0, %s44
  %s46 = sadd.s32 0, 0
  %p47 = scmp.lt.s32.totalorder %s46, 0
  %s48 = scalar_select %p47, %s46, 0
  %s49 = smul.u32 4, %s48
  %s50 = ssub.s32 2, %s49
  %s51 = smul.u32 128, %s50
  %p52 = scmp.eq.s32.totalorder 0, 0
  // Predicated region
  $region6: #{_observe.1} parent=0 // pred_check
    %p53 = pneg %p52
  $region7: #{_observe.1} parent=0 // pred_check_branch
    %55 = sbr.rel (%p53) target = $region9
  $region8: #{_observe.1} parent=0 // pred_region
    %56 = vst [vmem:[%s1] sm:$0xff] inf
    %57 = vst [vmem:[%s2] sm:$0xff] -inf
  $region9: #{_observe.1} parent=0 // pred_fallthru
    _
  %v58 = vlaneseq
  %v59 = vshrl.u32 %v58, 7
  %v60 = vld [vmem:[%s1] sm:$0xff]
  %v61 = vld [vmem:[%s2] sm:$0xff]
  %v62 = vld [vmem:[%s45] sm:$0xff]
  %vm63 = vcmp.lt.s32.totalorder %v59, 16
  %v64 = vsel %vm63, %v62, inf
  %v65 = vsel %vm63, %v62, -inf
  %v66 = vmin.f32 %v60, %v64
  %v67 = vmax.f32 %v61, %v65
  %s68 = scalar_lea.vmem %s45, 8
  %v69 = vld [vmem:[%s68] sm:$0xff]
  %v70 = vadd.s32 %v59, 8
  %vm71 = vcmp.lt.s32.totalorder %v70, 16
  %v72 = vsel %vm71, %v69, inf
  %v73 = vsel %vm71, %v69, -inf
  %v74 = vmin.f32 %v66, %v72
  %v75 = vmax.f32 %v67, %v73
  %s76 = scalar_lea.vmem %s45, 16
  %v77 = vld [vmem:[%s76] sm:$0xff]
  %v78 = vadd.s32 %v59, 16
  %vm79 = vcmp.lt.s32.totalorder %v78, 16
  %v80 = vsel %vm79, %v77, inf
  %v81 = vsel %vm79, %v77, -inf
  %v82 = vmin.f32 %v74, %v80
  %v83 = vmax.f32 %v75, %v81
  %s84 = scalar_lea.vmem %s45, 24
  %v85 = vld [vmem:[%s84] sm:$0xff]
  %v86 = vadd.s32 %v59, 24
  %vm87 = vcmp.lt.s32.totalorder %v86, 16
  %v88 = vsel %vm87, %v85, inf
  %v89 = vsel %vm87, %v85, -inf
  %v90 = vmin.f32 %v82, %v88
  %v91 = vmax.f32 %v83, %v89
  %92 = vst [vmem:[%s1] sm:$0xff] %v90
  %93 = vst [vmem:[%s2] sm:$0xff] %v91
  // Predicated region
  $region10: #{_observe.1} parent=0 // pred_check
    _
  $region11: #{_observe.1} parent=0 // pred_check_branch
    %95 = sbr.rel (0) target = $region13
  $region12: #{_observe.1} parent=0 // pred_region
    _
  $region13: #{_observe.1} parent=0 // pred_fallthru
    _
  // Predicated region
  $region14: #{_observe.1} parent=0 // pred_check
    _
  $region15: #{_observe.1} parent=0 // pred_check_branch
    %97 = sbr.rel (0) target = $region17
  $region16: #{_observe.1} parent=0 // pred_region
    _
  $region17: #{_observe.1} parent=0 // pred_fallthru
    _
  // Predicated region
  $region18: #{_observe.1} parent=0 // pred_check
    _
  $region19: #{_observe.1} parent=0 // pred_check_branch
    %99 = sbr.rel (0) target = $region21
  $region20: #{_observe.1} parent=0 // pred_region
    _
  $region21: #{_observe.1} parent=0 // pred_fallthru
    _
  // Predicated region
  $region22: #{_observe.1} parent=0 // pred_check
    _
  $region23: #{_observe.1} parent=0 // pred_check_branch
    %101 = sbr.rel (0) target = $region25
  $region24: #{_observe.1} parent=0 // pred_region
    _
  $region25: #{_observe.1} parent=0 // pred_fallthru
    _

</llo_original>
